<compile_context>
chip_gen: v5e
topology: v5e:2x2
jax: 0.10.0
libtpu: 0.0.40
codegen_flags: <defaults>
</compile_context>

<pallas_src>
import numpy as np
import jax
import jax.numpy as jnp
from jax import lax
from jax.experimental import pallas as pl
from jax.experimental.pallas import tpu as pltpu


# --------------------------------------------------------------------------- #
# Host-side tiling choice + banded weight construction
# --------------------------------------------------------------------------- #
def _choose_tiles(l_in: int, l_out: int, c: int):
    """Pick (TJ, TK, n_r, grid_j).

    TJ  : output rows per grid step (multiple of 8, or == l_out).
    TK  : input columns per band block (multiple of 128 dividing l_in, or == l_in).
    n_r : consecutive TK blocks each output tile needs (1 or 2).
    """
    # VMEM heuristic: one (C, TK) input window <= ~2 MiB, TK <= 4096.
    tk_cap = max(128, min(4096, ((2 * 1024 * 1024) // (4 * max(c, 1))) // 128 * 128))
    choice = None
    tk = 128
    while tk <= min(l_in, tk_cap):
        if l_in % tk == 0:
            # Largest TJ with (TJ-1)*scale + 2 (+2 slack) <= TK so each output tile's
            # 2-tap footprint fits in two consecutive TK blocks.  Integer arithmetic.
            tj = min((tk - 4) * l_out // l_in + 1, l_out, 256)
            if tj < l_out:
                tj = (tj // 8) * 8
            if tj == l_out or tj >= 8:
                choice = (tj, tk)
                if tj >= 64 or tj == l_out:  # big enough to amortize ~0.35us/step overhead
                    break
        tk += 128
    if choice is None:
        # No usable 128-multiple divisor of L (or extreme downsample): dense along L.
        # TODO(synk): pad L up to a multiple of 128 on the host to re-enable banding here.
        tj = l_out if l_out <= 1024 else 512
        choice = (tj, l_in)
    tj, tk = choice
    n_k = l_in // tk
    n_r = min(2, n_k)
    grid_j = -(-l_out // tj)
    return tj, tk, n_r, grid_j


def _build_band_weights(l_in, l_out, tj, tk, n_r, grid_j):
    """Banded weights reproducing F.interpolate(mode='linear', align_corners=False).

    Returns:
      a_band  : float32 (grid_j*tj, n_r*tk); row j holds the 2 taps of output row j,
                shifted so column 0 maps to input column k_start[j//tj]*tk.
      k_start : int32 (grid_j,); input-window start along L in units of TK blocks.
    """
    scale = l_in / l_out
    n_k = l_in // tk

    # Per-output-tile window start (block units).
    t = np.arange(grid_j, dtype=np.int64)
    src_first = np.maximum((t * tj + 0.5) * scale - 0.5, 0.0)
    i_first = np.clip(np.floor(src_first).astype(np.int64), 0, l_in - 1)
    k_start = np.clip(i_first // tk, 0, n_k - n_r)

    # Per-output-row taps (half-pixel centers, clamped; antialias=False).
    j = np.arange(grid_j * tj, dtype=np.int64)
    valid = j < l_out
    jj = np.minimum(j, l_out - 1)
    src = np.maximum((jj + 0.5) * scale - 0.5, 0.0)
    i0 = np.clip(np.floor(src).astype(np.int64), 0, l_in - 1)
    i1 = np.minimum(i0 + 1, l_in - 1)
    w1 = src - i0
    w0 = 1.0 - w1

    base = k_start[j // tj] * tk
    c0 = i0 - base
    c1 = i1 - base
    assert int(c0.min()) >= 0 and int(c1.max()) < n_r * tk, (
        "interpolation band does not fit its input window (tiling bug)")

    a = np.zeros((grid_j * tj, n_r * tk), dtype=np.float64)
    np.add.at(a, (j, c0), np.where(valid, w0, 0.0))  # .add handles i0 == i1 at right edge
    np.add.at(a, (j, c1), np.where(valid, w1, 0.0))
    return a.astype(np.float32), k_start.astype(np.int32)


# --------------------------------------------------------------------------- #
# Kernel
# --------------------------------------------------------------------------- #
def _resample_transpose_kernel(k_start_ref, x_ref, a_ref, o_ref, acc_ref):
    # k_start_ref : SMEM (grid_j,) int32   (consumed only by the index_maps)
    # x_ref       : (1, C, TK)   input window (band block r of output tile t)
    # a_ref       : (TJ, TK)     banded interpolation weights for (t, r)
    # o_ref       : (1, TJ, C)   output tile, written once on the last band step
    # acc_ref     : (TJ, C) f32  accumulator scratch
    del k_start_ref
    r = pl.program_id(2)

    @pl.when(r == 0)
    def _init():
        acc_ref[...] = jnp.zeros_like(acc_ref)

    # out[j, c] = sum_i a[j, i] * x[c, i]  -> resample + NCW->NWC transpose in one MXU dot.
    acc_ref[...] += lax.dot_general(
        a_ref[...], x_ref[0],
        dimension_numbers=(((1,), (1,)), ((), ())),
        preferred_element_type=jnp.float32,
    )

    @pl.when(r == pl.num_programs(2) - 1)
    def _finalize():
        o_ref[0] = acc_ref[...].astype(o_ref.dtype)


# --------------------------------------------------------------------------- #
# Wrapper
# --------------------------------------------------------------------------- #
def encoder_head(x: jnp.ndarray, encoder_block_size: int) -> jnp.ndarray:
    """x: (B, C, L) -> (B, L_out, C), matching EncoderHead.forward (mode='linear')."""
    B, C, L = x.shape
    if L <= encoder_block_size:
        # Pass-through: pure NCW -> NWC transpose.  Memory bound; XLA handles it at
        # HBM roofline — no Pallas matmul against an identity matrix.
        return jnp.swapaxes(x, 1, 2)

    l_out = encoder_block_size
    tj, tk, n_r, grid_j = _choose_tiles(L, l_out, C)
    a_np, k_start_np = _build_band_weights(L, l_out, tj, tk, n_r, grid_j)

    # Keep interpolation weights in f32 (bf16 only when x itself is bf16).
    a_dtype = jnp.bfloat16 if x.dtype == jnp.bfloat16 else jnp.float32
    a = jnp.asarray(a_np, dtype=a_dtype)
    k_start = jnp.asarray(k_start_np, dtype=jnp.int32)

    return pl.pallas_call(
        _resample_transpose_kernel,
        out_shape=jax.ShapeDtypeStruct((B, l_out, C), x.dtype),
        grid_spec=pltpu.PrefetchScalarGridSpec(
            num_scalar_prefetch=1,
            grid=(B, grid_j, n_r),
            in_specs=[
                # Input window (1, C, TK) at L-block (k_start[t] + r): only the band
                # of x that output tile t touches is ever DMA'd.
                pl.BlockSpec((1, C, tk), lambda b, t, r, ks: (b, 0, ks[t] + r)),
                # Banded weights (TJ, TK) for (output tile t, band step r).
                pl.BlockSpec((tj, tk), lambda b, t, r, ks: (t, r)),
            ],
            out_specs=pl.BlockSpec((1, tj, C), lambda b, t, r, ks: (b, t, 0)),
            scratch_shapes=[pltpu.VMEM((tj, C), jnp.float32)],
        ),
        compiler_params=pltpu.CompilerParams(
            dimension_semantics=("parallel", "parallel", "arbitrary"),
        ),
    )(k_start, x, a)


# --------------------------------------------------------------------------- #
# Pure-JAX reference (PyTorch-equivalent) + self-test
# --------------------------------------------------------------------------- #
def _encoder_head_ref(x, encoder_block_size):
    B, C, L = x.shape
    if L <= encoder_block_size:
        return jnp.swapaxes(x, 1, 2)
    l_out = encoder_block_size
    scale = L / l_out
    j = jnp.arange(l_out)
    src = jnp.maximum((j + 0.5) * scale - 0.5, 0.0)
    i0 = jnp.clip(jnp.floor(src).astype(jnp.int32), 0, L - 1)
    i1 = jnp.minimum(i0 + 1, L - 1)
    w1 = (src - i0).astype(jnp.float32)
    w0 = 1.0 - w1
    y = x[..., i0] * w0 + x[..., i1] * w1
    return jnp.swapaxes(y, 1, 2)


if __name__ == "__main__":
    key = jax.random.PRNGKey(0)
    k1, k2 = jax.random.split(key)

    # Case 1: tiny spec-scale shapes (dense-window fallback, n_r == 1).
    x1 = jax.random.normal(k1, (2, 8, 16), dtype=jnp.float32)
    out1 = jax.block_until_ready(encoder_head(x1, 8))
    ref1 = _encoder_head_ref(x1, 8)
    assert out1.shape == (2, 8, 8), out1.shape
    assert jnp.allclose(out1, ref1, atol=1e-5, rtol=1e-5), float(jnp.max(jnp.abs(out1 - ref1)))

    # Case 2: banded path (TK=256, TJ=64, n_r=2, scalar-prefetched window starts).
    x2 = jax.random.normal(k2, (2, 16, 1024), dtype=jnp.float32)
    out2 = jax.block_until_ready(encoder_head(x2, 256))
    ref2 = _encoder_head_ref(x2, 256)
    assert out2.shape == (2, 256, 16), out2.shape
    assert jnp.allclose(out2, ref2, atol=1e-5, rtol=1e-5), float(jnp.max(jnp.abs(out2 - ref2)))

    # Case 3: pass-through (L <= encoder_block_size) -> pure transpose.
    out3 = jax.block_until_ready(encoder_head(x1, 32))
    assert out3.shape == (2, 16, 8), out3.shape
    assert jnp.allclose(out3, jnp.swapaxes(x1, 1, 2))

    print("KERNEL_OK")
</pallas_src>

<mosaic_0001>
module attributes {stable_mosaic.version = 11 : i64} {
  func.func @_resample_transpose_kernel(%arg0: i32, %arg1: i32, %arg2: i32, %arg3: memref<1xi32, #tpu.memory_space<smem>>, %arg4: memref<1x8x16xf32, #tpu.memory_space<vmem>>, %arg5: memref<8x16xf32, #tpu.memory_space<vmem>>, %arg6: memref<1x8x8xf32, #tpu.memory_space<vmem>>, %arg7: memref<8x8xf32, #tpu.memory_space<vmem>>) attributes {dimension_semantics = [#tpu.dimension_semantics<parallel>, #tpu.dimension_semantics<parallel>, #tpu.dimension_semantics<arbitrary>], iteration_bounds = array<i64: 2, 1, 1>, scalar_prefetch = 1 : i64, scratch_operands = 1 : i64, tpu.core_type = #tpu.core_type<tc>, window_params = [{transform_indices = @transform_0, window_bounds = array<i64: 1, 8, 16>}, {transform_indices = @transform_1, window_bounds = array<i64: 8, 16>}, {transform_indices = @transform_2, window_bounds = array<i64: 1, 8, 8>}]} {
    %c0_i32 = arith.constant 0 : i32
    %0 = arith.cmpi eq, %arg2, %c0_i32 : i32
    %1 = arith.extui %0 : i1 to i32
    %c0_i32_0 = arith.constant 0 : i32
    %2 = arith.cmpi ne, %1, %c0_i32_0 : i32
    scf.if %2 {
      %cst_11 = arith.constant 0.000000e+00 : f32
      %13 = vector.broadcast %cst_11 : f32 to vector<8x8xf32>
      %c0_12 = arith.constant 0 : index
      %c0_13 = arith.constant 0 : index
      %14 = vector.load %arg7[%c0_12, %c0_13] : memref<8x8xf32, #tpu.memory_space<vmem>>, vector<8x8xf32>
      tpu.vector_store %arg7[%c0_12, %c0_13], %13 {strides = array<i32>} : memref<8x8xf32, #tpu.memory_space<vmem>>, vector<8x8xf32>,
    } else {
    }
    %c0 = arith.constant 0 : index
    %c0_1 = arith.constant 0 : index
    %3 = vector.load %arg7[%c0, %c0_1] : memref<8x8xf32, #tpu.memory_space<vmem>>, vector<8x8xf32>
    %c0_2 = arith.constant 0 : index
    %c0_3 = arith.constant 0 : index
    %4 = vector.load %arg5[%c0_2, %c0_3] : memref<8x16xf32, #tpu.memory_space<vmem>>, vector<8x16xf32>
    %c0_4 = arith.constant 0 : index
    %c0_5 = arith.constant 0 : index
    %c0_6 = arith.constant 0 : index
    %5 = vector.load %arg4[%c0_4, %c0_5, %c0_6] : memref<1x8x16xf32, #tpu.memory_space<vmem>>, vector<1x8x16xf32>
    %6 = vector.shape_cast %5 : vector<1x8x16xf32> to vector<8x16xf32>
    %cst = arith.constant dense<0.000000e+00> : vector<8x8xf32>
    %7 = tpu.matmul %4, %6, %cst {dimension_numbers = #tpu.dot_dimension_numbers<[1], [1], [0], [0], [0, 0, 1, 0], [], []>} : vector<8x16xf32>, vector<8x16xf32>, vector<8x8xf32> -> vector<8x8xf32>
    %8 = arith.addf %3, %7 : vector<8x8xf32>
    %c0_7 = arith.constant 0 : index
    %c0_8 = arith.constant 0 : index
    %9 = vector.load %arg7[%c0_7, %c0_8] : memref<8x8xf32, #tpu.memory_space<vmem>>, vector<8x8xf32>
    tpu.vector_store %arg7[%c0_7, %c0_8], %8 {strides = array<i32>} : memref<8x8xf32, #tpu.memory_space<vmem>>, vector<8x8xf32>,
    %c0_i32_9 = arith.constant 0 : i32
    %10 = arith.cmpi eq, %arg2, %c0_i32_9 : i32
    %11 = arith.extui %10 : i1 to i32
    %c0_i32_10 = arith.constant 0 : i32
    %12 = arith.cmpi ne, %11, %c0_i32_10 : i32
    scf.if %12 {
      %c0_11 = arith.constant 0 : index
      %c0_12 = arith.constant 0 : index
      %13 = vector.load %arg7[%c0_11, %c0_12] : memref<8x8xf32, #tpu.memory_space<vmem>>, vector<8x8xf32>
      %c0_13 = arith.constant 0 : index
      %c0_14 = arith.constant 0 : index
      %c0_15 = arith.constant 0 : index
      %14 = vector.load %arg6[%c0_13, %c0_14, %c0_15] : memref<1x8x8xf32, #tpu.memory_space<vmem>>, vector<1x8x8xf32>
      %15 = vector.shape_cast %14 : vector<1x8x8xf32> to vector<8x8xf32>
      %16 = vector.shape_cast %13 : vector<8x8xf32> to vector<1x8x8xf32>
      tpu.vector_store %arg6[%c0_13, %c0_14, %c0_15], %16 {strides = array<i32>} : memref<1x8x8xf32, #tpu.memory_space<vmem>>, vector<1x8x8xf32>,
    } else {
    }
    return
  }
  func.func @transform_0(%arg0: i32, %arg1: i32, %arg2: i32, %arg3: memref<1xi32, #tpu.memory_space<smem>>) -> (i32, i32, i32) {
    %0 = arith.index_cast %arg1 : i32 to index
    %1 = memref.load %arg3[%0] : memref<1xi32, #tpu.memory_space<smem>>
    %2 = arith.addi %1, %arg2 : i32
    %c0_i32 = arith.constant 0 : i32
    %c0_i32_0 = arith.constant 0 : i32
    return %arg0, %c0_i32, %2 : i32, i32, i32
  }
  func.func @transform_1(%arg0: i32, %arg1: i32, %arg2: i32, %arg3: memref<1xi32, #tpu.memory_space<smem>>) -> (i32, i32) {
    %c0_i32 = arith.constant 0 : i32
    return %arg1, %arg2 : i32, i32
  }
  func.func @transform_2(%arg0: i32, %arg1: i32, %arg2: i32, %arg3: memref<1xi32, #tpu.memory_space<smem>>) -> (i32, i32, i32) {
    %c0_i32 = arith.constant 0 : i32
    %c0_i32_0 = arith.constant 0 : i32
    return %arg0, %arg1, %c0_i32 : i32, i32, i32
  }
}

</mosaic_0001>

<llo_original>
// kernel: tpu_custom_call.1
$region0: #{tpu_custom_call.1}
  #allocation0 [shape = 'u32[]', space=smem, size = 0x4, offset = 0x4, fixed_abs, tag = 'smem constant byte address 0x4 - core index']
  #allocation1 [shape = 'u32[72,128]{1,0:T(1,128)}', space=vmem, size = 0x9000, scoped, tag = 'internal scratch']
  #allocation2 [shape = 'f32[8,8]{1,0:T(8,128)}', space=vmem, size = 0x1000, scoped, tag = 'scratch operand']
  #allocation3 [shape = 's32[1]{0}', space=sflag, size = 0x4, scoped, tag = 'scoped memory for tpu_custom_call.1']
  #allocation4 [shape = 's32[1]{0:T(128)S(6)}', space=smem, size = 0x200, scoped, tag = 'prefetched SMEM operand 0']
  %s0 = inlined_call_operand.<no memory space> [shape: s32[1], index: 0, kind: input, shape index: {}]
  %s1 = inlined_call_operand.hbm [shape: f32[2,8,16], index: 1, kind: input, shape index: {}]
  %s2 = inlined_call_operand.hbm [shape: f32[8,16], index: 2, kind: input, shape index: {}]
  %s3 = inlined_call_operand.hbm [shape: f32[2,8,8], index: 3, kind: output, shape index: {}]
  %s4 = sld [smem:[#allocation0]]
  $region57: #{tpu_custom_call.1} parent=0
    _
  %s6 = ssub.s32 1, %s4
  %s7 = scalar_select 0, %s6, %s4
  %8 = sst [smem:[#allocation4]] %s0
  $region1: #{tpu_custom_call.1} parent=0
    #allocation5 [shape = 'u8[8192]{0}', space=vmem, size = 0x2000, scoped, tag = 'input window, operand 1']
    #allocation6 [shape = 's32[2]{0}', space=sflag, size = 0x8, scoped, tag = 'scoped memory for tpu_custom_call.1']
    #allocation7 [shape = 's32[2]{0}', space=sflag, size = 0x8, scoped, tag = 'scoped memory for tpu_custom_call.1']
    #allocation8 [shape = 'u8[4096]{0}', space=vmem, size = 0x1000, scoped, tag = 'input window, operand 2, single buffered']
    #allocation9 [shape = 's32[1]{0}', space=sflag, size = 0x4, scoped, tag = 'scoped memory for tpu_custom_call.1']
    #allocation10 [shape = 'u8[8192]{0}', space=vmem, size = 0x2000, scoped, tag = 'output window, operand 0']
    %9 = vsyncpa [#allocation6], 0
    %s10 = scalar_lea.sflag [#allocation6], 1
    %11 = vsyncpa %s10, 0
    %12 = vsyncpa [#allocation9], 0
    %13 = vsyncpa [#allocation7], 0
    %s14 = scalar_lea.sflag [#allocation7], 1
    %15 = vsyncpa %s14, 0
    loop: start=0, step=1, limit=4
    $region2: #{tpu_custom_call.1} parent=1 // loop_pre_header
      _
    $region3: #{tpu_custom_call.1} parent=1 // loop_header
      %s17 = sphi 0, %s21
      %p18 = scmp.ge.s32.totalorder %s17, 4
      %s24 = sphi 0, %s43
      %s25 = sphi 0, %s39
      %s26 = sphi 0, %s35
      %s27 = sphi 0, %s24
      %s28 = sphi 0, %s25
      %s29 = sphi 0, %s26
      %s30 = sphi 0, %s27
      %s31 = sphi 0, %s28
      %s32 = sphi 0, %s29
      %s52 = sphi 0, %s54
      %s55 = sphi 0, %s52
      %s56 = sphi 0, %s55
      %s72 = sphi 0, %s56
      %s80 = sphi 0, %s82
      %s83 = sphi 0, %s80
      %s84 = sphi 0, %s83
      %s100 = sphi 0, %s84
      %s108 = sphi 0, %s110
      %s111 = sphi 0, %s108
      %s112 = sphi 0, %s111
      %s128 = sphi 0, %s112
    $region4: #{tpu_custom_call.1} parent=1 // loop_header_branch
      %20 = sbr.rel (%p18) target = $region8
    $region5: #{tpu_custom_call.1} parent=1 // loop_body
      %s22 = ssub.s32 %s17, 1
      %s23 = ssub.s32 %s17, 2
      %s33 = sadd.s32 1, %s26
      %p34 = scmp.ge.s32.totalorder %s33, 1
      %s35 = scalar_select %p34, 0, %s33
      %s36 = sadd.s32 1, %s25
      %s37 = scalar_select %p34, %s36, %s25
      %p38 = scmp.ge.s32.totalorder %s37, 1
      %s39 = scalar_select %p38, 0, %s37
      %s40 = sadd.s32 1, %s24
      %s41 = scalar_select %p38, %s40, %s24
      %p42 = scmp.ge.s32.totalorder %s41, 2
      %s43 = scalar_select %p42, 0, %s41
      %s44 = sld [smem:[#allocation4 + %s25]]
      %s45 = sadd.s32 %s44, %s26
      %s46 = sld [smem:[#allocation4 + %s39]]
      %s47 = sadd.s32 %s46, %s35
      %s48 = ssub.s32 %s24, %s43
      %s49 = ssub.s32 %s45, %s47
      %s50 = sor.u32 %s48, %s49
      %p51 = scmp.eq.s32.totalorder %s50, 0
      %s53 = sadd.s32 %s52, 1
      %s54 = scalar_select %p51, %s52, %s53
      %p57 = pneg %p51
      %p58 = scmp.eq.s32.totalorder %s17, 1
      %p59 = por %p57, %p58
      %p60 = scmp.ne.s32.totalorder %s52, %s55
      %p61 = scmp.eq.s32.totalorder %s17, 0
      %p62 = por %p60, %p61
      %p63 = scmp.ne.s32.totalorder %s52, %s55
      %p64 = scmp.eq.s32.totalorder %s22, 1
      %p65 = por %p63, %p64
      %p66 = scmp.ne.s32.totalorder %s55, %s56
      %p67 = scmp.eq.s32.totalorder %s22, 0
      %p68 = por %p66, %p67
      %p69 = scmp.ne.s32.totalorder %s55, %s56
      %p70 = scmp.eq.s32.totalorder %s23, 1
      %p71 = por %p69, %p70
      %p73 = scmp.ne.s32.totalorder %s56, %s72
      %p74 = scmp.eq.s32.totalorder %s23, 0
      %p75 = por %p73, %p74
      %s76 = ssub.s32 %s25, %s39
      %s77 = ssub.s32 %s26, %s35
      %s78 = sor.u32 %s76, %s77
      %p79 = scmp.eq.s32.totalorder %s78, 0
      %s81 = sadd.s32 %s80, 1
      %s82 = scalar_select %p79, %s80, %s81
      %p85 = pneg %p79
      %p86 = scmp.eq.s32.totalorder %s17, 1
      %p87 = por %p85, %p86
      %p88 = scmp.ne.s32.totalorder %s80, %s83
      %p89 = scmp.eq.s32.totalorder %s17, 0
      %p90 = por %p88, %p89
      %p91 = scmp.ne.s32.totalorder %s80, %s83
      %p92 = scmp.eq.s32.totalorder %s22, 1
      %p93 = por %p91, %p92
      %p94 = scmp.ne.s32.totalorder %s83, %s84
      %p95 = scmp.eq.s32.totalorder %s22, 0
      %p96 = por %p94, %p95
      %p97 = scmp.ne.s32.totalorder %s83, %s84
      %p98 = scmp.eq.s32.totalorder %s23, 1
      %p99 = por %p97, %p98
      %p101 = scmp.ne.s32.totalorder %s84, %s100
      %p102 = scmp.eq.s32.totalorder %s23, 0
      %p103 = por %p101, %p102
      %s104 = ssub.s32 %s24, %s43
      %s105 = ssub.s32 %s25, %s39
      %s106 = sor.u32 %s104, %s105
      %p107 = scmp.eq.s32.totalorder %s106, 0
      %s109 = sadd.s32 %s108, 1
      %s110 = scalar_select %p107, %s108, %s109
      %p113 = pneg %p107
      %p114 = scmp.eq.s32.totalorder %s17, 1
      %p115 = por %p113, %p114
      %p116 = scmp.ne.s32.totalorder %s108, %s111
      %p117 = scmp.eq.s32.totalorder %s17, 0
      %p118 = por %p116, %p117
      %p119 = scmp.ne.s32.totalorder %s108, %s111
      %p120 = scmp.eq.s32.totalorder %s22, 1
      %p121 = por %p119, %p120
      %p122 = scmp.ne.s32.totalorder %s111, %s112
      %p123 = scmp.eq.s32.totalorder %s22, 0
      %p124 = por %p122, %p123
      %p125 = scmp.ne.s32.totalorder %s111, %s112
      %p126 = scmp.eq.s32.totalorder %s23, 1
      %p127 = por %p125, %p126
      %p129 = scmp.ne.s32.totalorder %s112, %s128
      %p130 = scmp.eq.s32.totalorder %s23, 0
      %p131 = por %p129, %p130
      %p132 = scmp.le.s32.totalorder 1, %s17
      %p133 = scmp.lt.s32.totalorder %s17, 3
      %p134 = pnand %p132, %p133
      %p135 = pneg %p134
      // Predicated region
      $region9: #{tpu_custom_call.1} parent=5 // pred_check
        _
      $region10: #{tpu_custom_call.1} parent=5 // pred_check_branch
        %137 = sbr.rel (%p134) target = $region12
      $region11: #{tpu_custom_call.1} parent=5 // pred_region
        %s138 = ssub.s32 %s17, 1
        // Predicated region
        $region13: #{tpu_custom_call.1} parent=11 // pred_check
          %p139 = pneg %p96
        $region14: #{tpu_custom_call.1} parent=11 // pred_check_branch
          %141 = sbr.rel (%p139) target = $region16
        $region15: #{tpu_custom_call.1} parent=11 // pred_region
          %143 = vsyncadd [#allocation9], 0
          %s144 = sadd.s32 %s29, %s28
          %s145 = smul.addr %s144, 8
          %s146 = scalar_lea.hbm %s2, %s145
          %s148 = sshll.u32 %s146, 4
          %s149 = int_to_ptr.hbm [resolvable:$true] %s148
          %s150 = sshll.u32 [#allocation8], 4
          %s151 = int_to_ptr.vmem [resolvable:$true] %s150
          %153 = dma.hbm_to_vmem [thread:$0]  %s149, 128, %s151, [#allocation9]
        $region16: #{tpu_custom_call.1} parent=11 // pred_fallthru
          _
      $region12: #{tpu_custom_call.1} parent=5 // pred_fallthru
        _
      %p154 = scmp.lt.s32.totalorder %s17, 2
      // Predicated region
      $region17: #{tpu_custom_call.1} parent=5 // pred_check
        %p155 = pneg %p154
      $region18: #{tpu_custom_call.1} parent=5 // pred_check_branch
        %157 = sbr.rel (%p155) target = $region20
      $region19: #{tpu_custom_call.1} parent=5 // pred_region
        // Predicated region
        $region21: #{tpu_custom_call.1} parent=19 // pred_check
          %p158 = pneg %p62
        $region22: #{tpu_custom_call.1} parent=19 // pred_check_branch
          %160 = sbr.rel (%p158) target = $region24
        $region23: #{tpu_custom_call.1} parent=19 // pred_region
          %s161 = sand.u32 %s52, 1
          %s162 = scalar_lea.sflag [#allocation6], %s161
          %s163 = sand.u32 %s52, 1
          %s164 = smul.addr %s163, 8
          %s165 = scalar_lea.vmem [#allocation5], %s164
          %s166 = sld [smem:[#allocation4 + %s25]]
          %s167 = sadd.s32 %s166, %s26
          %169 = vsyncadd %s162, 0
          %s170 = sadd.s32 %s167, %s24
          %s171 = smul.addr %s170, 8
          %s172 = scalar_lea.hbm %s1, %s171
          %s174 = sshll.u32 %s172, 4
          %s175 = int_to_ptr.hbm [resolvable:$true] %s174
          %s176 = sshll.u32 %s165, 4
          %s177 = int_to_ptr.vmem [resolvable:$true] %s176
          %179 = dma.hbm_to_vmem [thread:$0]  %s175, 128, %s177, %s162
        $region24: #{tpu_custom_call.1} parent=19 // pred_fallthru
          _
      $region20: #{tpu_custom_call.1} parent=5 // pred_fallthru
        _
      %p180 = scmp.le.s32.totalorder 1, %s17
      %p181 = scmp.lt.s32.totalorder %s17, 3
      %p182 = pnand %p180, %p181
      %p183 = pneg %p182
      // Predicated region
      $region25: #{tpu_custom_call.1} parent=5 // pred_check
        _
      $region26: #{tpu_custom_call.1} parent=5 // pred_check_branch
        %185 = sbr.rel (%p182) target = $region28
      $region27: #{tpu_custom_call.1} parent=5 // pred_region
        %s186 = ssub.s32 %s17, 1
        %s187 = sand.u32 %s55, 1
        %s188 = scalar_lea.sflag [#allocation6], %s187
        %s189 = sand.u32 %s55, 1
        %s190 = smul.addr %s189, 8
        %s191 = scalar_lea.vmem [#allocation5], %s190
        // Predicated region
        $region29: #{tpu_custom_call.1} parent=27 // pred_check
          %p192 = pneg %p68
        $region30: #{tpu_custom_call.1} parent=27 // pred_check_branch
          %194 = sbr.rel (%p192) target = $region32
        $region31: #{tpu_custom_call.1} parent=27 // pred_region
          %196 = dma.done %s188, 128
        $region32: #{tpu_custom_call.1} parent=27 // pred_fallthru
          _
        // Predicated region
        $region33: #{tpu_custom_call.1} parent=27 // pred_check
          %p197 = pneg %p96
        $region34: #{tpu_custom_call.1} parent=27 // pred_check_branch
          %199 = sbr.rel (%p197) target = $region36
        $region35: #{tpu_custom_call.1} parent=27 // pred_region
          %201 = dma.done [#allocation9], 128
        $region36: #{tpu_custom_call.1} parent=27 // pred_fallthru
          _
        %s202 = sand.u32 %s55, 1
        %s203 = scalar_lea.sflag [#allocation6], %s202
        %s204 = sand.u32 %s55, 1
        %s205 = smul.addr %s204, 8
        %s206 = scalar_lea.vmem [#allocation5], %s205
        %p207 = pneg %p68
        %p208 = pneg %p65
        %p209 = pneg %p96
        %p210 = pneg %p93
        %p211 = pneg %p124
        %p212 = pneg %p121
        %s213 = sand.u32 %s111, 1
        %s214 = scalar_lea.sflag [#allocation7], %s213
        %s215 = sand.u32 %s111, 1
        %s216 = smul.addr %s215, 8
        %s217 = scalar_lea.vmem [#allocation10], %s216
        %s218 = sld [smem:[#allocation4 + %s28]]
        %s219 = sadd.s32 %s218, %s29
        %p220 = scmp.eq.s32.totalorder %s29, 0
        // Predicated region
        $region37: #{tpu_custom_call.1} parent=27 // pred_check
          %p221 = pneg %p220
        $region38: #{tpu_custom_call.1} parent=27 // pred_check_branch
          %223 = sbr.rel (%p221) target = $region40
        $region39: #{tpu_custom_call.1} parent=27 // pred_region
          %vm224 = vcmask 64512
          %225 = vst.msk [vmem:[#allocation2] sm:$0xff] %vm224, 0.0
        $region40: #{tpu_custom_call.1} parent=27 // pred_fallthru
          _
        %v226 = vld [vmem:[#allocation2] sm:$0xff]
        %v227 = vld [vmem:[#allocation8] sm:$0xff]
        %v228 = vld [vmem:[%s191] sm:$0xff]
        %vm229 = vcmask 130048
        %v231 = vsel %vm229, %v227, 0
        %v234 = vsel %vm229, %v228, 0
        %236 = vmatpush.xpose.msra.mxu0 0.0
        %237 = vmatpush.xpose.msra.mxu0 0.0
        %238 = vmatpush.xpose.msra.mxu0 0.0
        %239 = vmatpush.xpose.msra.mxu0 0.0
        %240 = vmatpush.xpose.msra.mxu0 0.0
        %241 = vmatpush.xpose.msra.mxu0 0.0
        %242 = vmatpush.xpose.msra.mxu0 0.0
        %243 = vmatpush.xpose.msra.mxu0 0.0
        %244 = vmatpush.xpose.msra.mxu0 0.0
        %245 = vmatpush.xpose.msra.mxu0 0.0
        %246 = vmatpush.xpose.msra.mxu0 0.0
        %247 = vmatpush.xpose.msra.mxu0 0.0
        %248 = vmatpush.xpose.msra.mxu0 0.0
        %249 = vmatpush.xpose.msra.mxu0 0.0
        %250 = vmatpush.xpose.msra.mxu0 0.0
        %251 = vmatpush.xpose.msra.mxu0 %v234
        %252 = vmatmul.f32.gmra.mxu0 %v231
        %v253 = vpop.f32.mrf.mxu0
        %v254 = vadd.f32 0.0, %v253
        %255 = vdwg.mxu0
        %v256 = vadd.f32 %v226, %v254
        %vm257 = vcmask 64512
        %258 = vst.msk [vmem:[#allocation2] sm:$0xff] %vm257, %v256
        // Predicated region
        $region41: #{tpu_custom_call.1} parent=27 // pred_check
          %p259 = pneg %p220
        $region42: #{tpu_custom_call.1} parent=27 // pred_check_branch
          %261 = sbr.rel (%p259) target = $region44
        $region43: #{tpu_custom_call.1} parent=27 // pred_region
          %v262 = vld [vmem:[#allocation2] sm:$0xff]
          %263 = vst.msk [vmem:[%s217] sm:$0xff] %vm257, %v262
        $region44: #{tpu_custom_call.1} parent=27 // pred_fallthru
          _
        %s264 = sand.u32 %s111, 1
        %s265 = scalar_lea.sflag [#allocation7], %s264
        %s266 = sand.u32 %s111, 1
        %s267 = smul.addr %s266, 8
        %s268 = scalar_lea.vmem [#allocation10], %s267
        // Predicated region
        $region45: #{tpu_custom_call.1} parent=27 // pred_check
          %p269 = pneg %p121
        $region46: #{tpu_custom_call.1} parent=27 // pred_check_branch
          %271 = sbr.rel (%p269) target = $region48
        $region47: #{tpu_custom_call.1} parent=27 // pred_region
          %273 = vsyncadd %s265, 0
          %s274 = sadd.s32 %s28, %s27
          %s275 = smul.addr %s274, 8
          %s276 = scalar_lea.hbm %s3, %s275
          %s278 = sshll.u32 %s268, 4
          %s279 = int_to_ptr.vmem [resolvable:$true] %s278
          %s280 = sshll.u32 %s276, 4
          %s281 = int_to_ptr.hbm [resolvable:$true] %s280
          %283 = dma.vmem_to_hbm [thread:$0]  %s279, 128, %s281, %s265
        $region48: #{tpu_custom_call.1} parent=27 // pred_fallthru
          _
      $region28: #{tpu_custom_call.1} parent=5 // pred_fallthru
        _
      %p284 = scmp.le.s32.totalorder 2, %s17
      // Predicated region
      $region49: #{tpu_custom_call.1} parent=5 // pred_check
        %p285 = pneg %p284
      $region50: #{tpu_custom_call.1} parent=5 // pred_check_branch
        %287 = sbr.rel (%p285) target = $region52
      $region51: #{tpu_custom_call.1} parent=5 // pred_region
        %s288 = ssub.s32 %s17, 2
        // Predicated region
        $region53: #{tpu_custom_call.1} parent=51 // pred_check
          %p289 = pneg %p127
        $region54: #{tpu_custom_call.1} parent=51 // pred_check_branch
          %291 = sbr.rel (%p289) target = $region56
        $region55: #{tpu_custom_call.1} parent=51 // pred_region
          %s292 = sand.u32 %s112, 1
          %s293 = scalar_lea.sflag [#allocation7], %s292
          %s294 = sand.u32 %s112, 1
          %s295 = smul.addr %s294, 8
          %s296 = scalar_lea.vmem [#allocation10], %s295
          %298 = dma.done %s293, 128
        $region56: #{tpu_custom_call.1} parent=51 // pred_fallthru
          _
      $region52: #{tpu_custom_call.1} parent=5 // pred_fallthru
        _
    $region6: #{tpu_custom_call.1} parent=1 // loop_footer
      %s21 = sadd.s32 1, %s17
    $region7: #{tpu_custom_call.1} parent=1 // loop_footer_branch
      %16 = sbr.rel target = $region3
    $region8: #{tpu_custom_call.1} parent=1 // loop_exit
      _
    %299 = vsyncpa [#allocation6], 1
    %s300 = scalar_lea.sflag [#allocation6], 1
    %301 = vsyncpa %s300, 1
    %302 = vsyncpa [#allocation9], 1
    %303 = vsyncpa [#allocation7], 1
    %s304 = scalar_lea.sflag [#allocation7], 1
    %305 = vsyncpa %s304, 1

</llo_original>
